<compile_context>
chip_gen: v7x
topology: tpu7x:2x2x1
jax: 0.10.0
libtpu: 0.0.40
codegen_flags: <defaults>
</compile_context>

<pallas_src>
import functools

import jax
import jax.numpy as jnp
from jax import lax
from jax.experimental import pallas as pl
from jax.experimental.pallas import tpu as pltpu


def _round_up(a: int, b: int) -> int:
    return ((a + b - 1) // b) * b


def _vmem_limit_bytes() -> int:
    """Generation-aware scoped-VMEM limit (~3/4 of physical per-TC VMEM)."""
    cap = 64 * 1024 * 1024  # v7x per-TC VMEM; smallest of the target gens
    try:
        cap = int(pltpu.get_tpu_info().vmem_capacity_bytes)
    except Exception:
        pass
    return min((cap * 3) // 4, 96 * 1024 * 1024)


# ---------------------------------------------------------------------------
# Small-problem path: whole arrays resident in VMEM, single kernel invocation.
# ---------------------------------------------------------------------------
def _small_kernel(x_ref, w_ref, b_ref, o_ref):
    # NT matmul: contract the last dims of x (Bp, Mp) and W (Kp, Mp) directly,
    # so the MXU consumes W without an XLU transpose.
    acc = lax.dot_general(
        x_ref[...],
        w_ref[...],
        dimension_numbers=(((1,), (1,)), ((), ())),
        preferred_element_type=jnp.float32,
    )
    o_ref[...] = (acc + b_ref[...]).astype(o_ref.dtype)


@jax.jit
def _last_layer_small(x, W, b):
    B, M = x.shape
    K = W.shape[0]
    Bp, Mp, Kp = _round_up(B, 8), _round_up(M, 128), _round_up(K, 128)
    x_p = jnp.pad(x, ((0, Bp - B), (0, Mp - M))).astype(jnp.float32)
    W_p = jnp.pad(W, ((0, Kp - K), (0, Mp - M))).astype(jnp.float32)
    b_p = jnp.pad(b, (0, Kp - K)).astype(jnp.float32).reshape(1, Kp)
    out_p = pl.pallas_call(
        _small_kernel,
        out_shape=jax.ShapeDtypeStruct((Bp, Kp), jnp.float32),
    )(x_p, W_p, b_p)
    return out_p[:B, :K].astype(x.dtype)


# ---------------------------------------------------------------------------
# Tiled path: bf16 inputs, f32 accumulation directly into the output block.
# ---------------------------------------------------------------------------
def _tiled_kernel(x_ref, w_ref, b_ref, o_ref):
    # Grid = (Bp/tm, Kp/tn, Mp/tk); reduction (M) axis innermost.  The f32
    # output block is resident across k and doubles as the accumulator, so no
    # scratch buffer and no final full-tile copy are needed.
    k = pl.program_id(2)

    @pl.when(k == 0)
    def _():
        o_ref[...] = jnp.broadcast_to(b_ref[...], o_ref.shape)

    o_ref[...] += lax.dot_general(
        x_ref[...],
        w_ref[...],
        dimension_numbers=(((1,), (1,)), ((), ())),
        preferred_element_type=jnp.float32,
    )


def _pick_tiles(B: int, M: int, K: int):
    # tm = whole (16-aligned, bf16 sublane packing) batch when B is small, so
    # the dominant W stream makes exactly one HBM pass; otherwise 256.
    Bp = _round_up(B, 16)
    tm = Bp if Bp <= 512 else 256
    # tn/tk: as large as the problem allows, capped at 512 (fills the 2x256
    # MXU on v6e/v7x; footprint stays a few MiB, far under every VMEM budget).
    tn = min(512, _round_up(K, 128))
    tk = min(512, _round_up(M, 128))
    return tm, tn, tk


def prepare_weights(W, b, *, tn: int, tk: int, weight_dtype=jnp.bfloat16):
    """Pad + cast the static parameters once at init time (not per forward)."""
    K, M = W.shape
    Kp, Mp = _round_up(K, tn), _round_up(M, tk)
    W_p = jnp.pad(W, ((0, Kp - K), (0, Mp - M))).astype(weight_dtype)
    b_p = jnp.pad(b, (0, Kp - K)).astype(jnp.float32).reshape(1, Kp)
    return W_p, b_p


@functools.partial(jax.jit, static_argnames=("K", "tm", "tn", "tk"))
def _last_layer_tiled(x, W_p, b_p, *, K, tm, tn, tk):
    B, M = x.shape
    Kp, Mp = W_p.shape
    Bp = _round_up(B, tm)
    x_p = jnp.pad(x, ((0, Bp - B), (0, Mp - M))).astype(W_p.dtype)

    grid = (Bp // tm, Kp // tn, Mp // tk)

    # Realistic traffic under this tiling: x re-read Kp/tn times, W re-read
    # Bp/tm times (== 1 for the small-batch classifier-head case).
    bytes_accessed = int(
        x_p.size * x_p.dtype.itemsize * (Kp // tn)
        + W_p.size * W_p.dtype.itemsize * (Bp // tm)
        + b_p.size * b_p.dtype.itemsize
        + Bp * Kp * 4
    )
    flops = 2 * Bp * Kp * Mp

    out_p = pl.pallas_call(
        _tiled_kernel,
        out_shape=jax.ShapeDtypeStruct((Bp, Kp), jnp.float32),
        grid_spec=pltpu.PrefetchScalarGridSpec(
            num_scalar_prefetch=0,
            grid=grid,
            in_specs=[
                pl.BlockSpec((tm, tk), lambda i, j, k: (i, k)),  # x tile
                pl.BlockSpec((tn, tk), lambda i, j, k: (j, k)),  # W tile (K-major, no transpose)
                pl.BlockSpec((1, tn), lambda i, j, k: (0, j)),   # bias row
            ],
            out_specs=pl.BlockSpec((tm, tn), lambda i, j, k: (i, j)),
        ),
        compiler_params=pltpu.CompilerParams(
            dimension_semantics=("parallel", "parallel", "arbitrary"),
            vmem_limit_bytes=_vmem_limit_bytes(),
        ),
        cost_estimate=pl.CostEstimate(
            flops=flops, transcendentals=0, bytes_accessed=bytes_accessed
        ),
    )(x_p, W_p, b_p)

    return out_p[:B, :K].astype(x.dtype)


# ---------------------------------------------------------------------------
# Public entry point (dispatches between the two paths).
# ---------------------------------------------------------------------------
_SMALL_BYTES = 2 * 1024 * 1024  # whole-problem f32 footprint threshold


def last_layer(x, W, b):
    """x: (B, M), W: (K, M), b: (K,)  ->  (B, K) = x @ W.T + b."""
    B, M = x.shape
    K, M2 = W.shape
    assert M == M2, "feature dims must match"
    Bp, Mp, Kp = _round_up(B, 8), _round_up(M, 128), _round_up(K, 128)
    footprint = 4 * (Bp * Mp + Kp * Mp + Bp * Kp)
    if footprint <= _SMALL_BYTES:
        return _last_layer_small(x, W, b)
    tm, tn, tk = _pick_tiles(B, M, K)
    # NOTE: in a real model, hoist prepare_weights() to parameter-init time.
    W_p, b_p = prepare_weights(W, b, tn=tn, tk=tk)
    return _last_layer_tiled(x, W_p, b_p, K=K, tm=tm, tn=tn, tk=tk)


def make_params(key, M, K):
    """Deterministic parameter init mirroring LastLayer.__init__."""
    W_raw = jax.random.normal(key, (K, M), dtype=jnp.float32)
    # geoopt.Sphere().projx: project each row onto the unit sphere.
    W = W_raw / jnp.linalg.norm(W_raw, axis=-1, keepdims=True)
    b = jnp.ones((K,), dtype=jnp.float32)
    return W, b


if __name__ == "__main__":
    key = jax.random.PRNGKey(0)
    k_x1, k_p1, k_x2, k_p2 = jax.random.split(key, 4)

    # 1) Tiny, module-consistent demo shapes: exercises the small (f32) path.
    B, M, K = 8, 32, 16
    x = jax.random.normal(k_x1, (B, M), dtype=jnp.float32)
    W, b = make_params(k_p1, M, K)
    out = jax.block_until_ready(last_layer(x, W, b))
    ref = x @ W.T + b
    assert out.shape == (B, K)
    assert jnp.allclose(out, ref, atol=1e-5, rtol=1e-5), "small-path mismatch"

    # 2) Exercise the tiled bf16 path (weights padded/cast once, as intended
    #    for production): W streams through HBM exactly once (Bp == tm).
    B2, M2, K2 = 8, 1024, 512
    x2 = jax.random.normal(k_x2, (B2, M2), dtype=jnp.float32)
    W2, b2 = make_params(k_p2, M2, K2)
    tm, tn, tk = _pick_tiles(B2, M2, K2)
    W2_p, b2_p = prepare_weights(W2, b2, tn=tn, tk=tk)
    out2 = jax.block_until_ready(
        _last_layer_tiled(x2, W2_p, b2_p, K=K2, tm=tm, tn=tn, tk=tk)
    )
    ref2 = x2 @ W2.T + b2
    assert out2.shape == (B2, K2)
    # bf16 inputs with f32 accumulation: relaxed tolerance vs. the f32 reference
    # (expected precision change, per review).
    assert jnp.allclose(out2, ref2, atol=5e-2, rtol=5e-2), "tiled-path mismatch"

    print("KERNEL_OK")
</pallas_src>

<mosaic_0001>
module attributes {stable_mosaic.version = 11 : i64} {
  func.func @_small_kernel(%arg0: memref<8x128xf32, #tpu.memory_space<vmem>>, %arg1: memref<128x128xf32, #tpu.memory_space<vmem>>, %arg2: memref<1x128xf32, #tpu.memory_space<vmem>>, %arg3: memref<8x128xf32, #tpu.memory_space<vmem>>) attributes {dimension_semantics = [], scalar_prefetch = 0 : i64, scratch_operands = 0 : i64, tpu.core_type = #tpu.core_type<tc>} {
    %c0 = arith.constant 0 : index
    %c0_0 = arith.constant 0 : index
    %0 = vector.load %arg0[%c0, %c0_0] : memref<8x128xf32, #tpu.memory_space<vmem>>, vector<8x128xf32>
    %c0_1 = arith.constant 0 : index
    %c0_2 = arith.constant 0 : index
    %1 = vector.load %arg1[%c0_1, %c0_2] : memref<128x128xf32, #tpu.memory_space<vmem>>, vector<128x128xf32>
    %cst = arith.constant dense<0.000000e+00> : vector<8x128xf32>
    %2 = tpu.matmul %0, %1, %cst {dimension_numbers = #tpu.dot_dimension_numbers<[1], [1], [0], [0], [0, 0, 1, 0], [], []>} : vector<8x128xf32>, vector<128x128xf32>, vector<8x128xf32> -> vector<8x128xf32>
    %c0_3 = arith.constant 0 : index
    %c0_4 = arith.constant 0 : index
    %3 = vector.load %arg2[%c0_3, %c0_4] : memref<1x128xf32, #tpu.memory_space<vmem>>, vector<1x128xf32>
    %4 = vector.broadcast %3 : vector<1x128xf32> to vector<8x128xf32>
    %5 = arith.addf %2, %4 : vector<8x128xf32>
    %c0_5 = arith.constant 0 : index
    %c0_6 = arith.constant 0 : index
    %6 = vector.load %arg3[%c0_5, %c0_6] : memref<8x128xf32, #tpu.memory_space<vmem>>, vector<8x128xf32>
    tpu.vector_store %arg3[%c0_5, %c0_6], %5 {strides = array<i32>} : memref<8x128xf32, #tpu.memory_space<vmem>>, vector<8x128xf32>,
    return
  }
}

</mosaic_0001>

<llo_original>
// kernel: _last_layer_small.1
$region0: #{_last_layer_small.1}
  #allocation0 [shape = 'u32[]', space=smem, size = 0x4, offset = 0x4, fixed_abs, tag = 'smem constant byte address 0x4 - core index']
  #allocation1 [shape = 'u32[144,128]{1,0:T(1,128)}', space=vmem, size = 0x12000, scoped, tag = 'internal scratch']
  %s0 = inlined_call_operand.vmem [shape: f32[8,128], index: 0, kind: input, shape index: {}]
  %s1 = inlined_call_operand.vmem [shape: f32[128,128], index: 1, kind: input, shape index: {}]
  %s2 = inlined_call_operand.vmem [shape: f32[1,128], index: 2, kind: input, shape index: {}]
  %s3 = inlined_call_operand.hbm [shape: f32[8,128], index: 3, kind: output, shape index: {}]
  %s4 = sld [smem:[#allocation0]]
  $region22: #{_last_layer_small.1} parent=0
    _
  %s6 = ssub.s32 1, %s4
  %s7 = scalar_select 0, %s6, %s4
  $region1: #{_last_layer_small.1} parent=0
    #allocation2 [shape = 'u8[4096]{0}', space=vmem, size = 0x1000, scoped, tag = 'output window, operand 0, single buffered']
    #allocation3 [shape = 's32[1]{0}', space=sflag, size = 0x4, scoped, tag = 'scoped memory for _last_layer_small.1']
    %8 = vsyncpa [#allocation3], 0
    // Predicated region
    $region2: #{_last_layer_small.1} parent=1 // pred_check
      _
    $region3: #{_last_layer_small.1} parent=1 // pred_check_branch
      %10 = sbr.rel (0) target = $region5
    $region4: #{_last_layer_small.1} parent=1 // pred_region
      _
    $region5: #{_last_layer_small.1} parent=1 // pred_fallthru
      _
    // Predicated region
    $region6: #{_last_layer_small.1} parent=1 // pred_check
      _
    $region7: #{_last_layer_small.1} parent=1 // pred_check_branch
      %12 = sbr.rel (0) target = $region9
    $region8: #{_last_layer_small.1} parent=1 // pred_region
      _
    $region9: #{_last_layer_small.1} parent=1 // pred_fallthru
      _
    // Predicated region
    $region10: #{_last_layer_small.1} parent=1 // pred_check
      _
    $region11: #{_last_layer_small.1} parent=1 // pred_check_branch
      %14 = sbr.rel (0) target = $region13
    $region12: #{_last_layer_small.1} parent=1 // pred_region
      _
    $region13: #{_last_layer_small.1} parent=1 // pred_fallthru
      _
    %v15 = vld [vmem:[%s0] sm:$0xff]
    %v16 = vld [vmem:[%s1] sm:$0xff]
    %v17 = vld [vmem:[%s1 + $0x8] sm:$0xff]
    %v18 = vld [vmem:[%s1 + $0x10] sm:$0xff]
    %v19 = vld [vmem:[%s1 + $0x18] sm:$0xff]
    %v20 = vld [vmem:[%s1 + $0x20] sm:$0xff]
    %v21 = vld [vmem:[%s1 + $0x28] sm:$0xff]
    %v22 = vld [vmem:[%s1 + $0x30] sm:$0xff]
    %v23 = vld [vmem:[%s1 + $0x38] sm:$0xff]
    %v24 = vld [vmem:[%s1 + $0x40] sm:$0xff]
    %v25 = vld [vmem:[%s1 + $0x48] sm:$0xff]
    %v26 = vld [vmem:[%s1 + $0x50] sm:$0xff]
    %v27 = vld [vmem:[%s1 + $0x58] sm:$0xff]
    %v28 = vld [vmem:[%s1 + $0x60] sm:$0xff]
    %v29 = vld [vmem:[%s1 + $0x68] sm:$0xff]
    %v30 = vld [vmem:[%s1 + $0x70] sm:$0xff]
    %v31 = vld [vmem:[%s1 + $0x78] sm:$0xff]
    %v32 = vld [vmem:[%s2] sm:$0x1]
    %v34 = vlaneseq
    %v35 = vshrl.u32 %v34, 7
    %v36 = vsub.s32 0, %v35
    %v37 = vrot.slane %v32, %v36
    %39 = vmatprep.subr.mxu0 0.0
    %40 = vmatpush1.xpose.msra.mxu0 %v16
    %41 = vmatprep.subr.mxu0 0.0
    %42 = vmatpush1.xpose.msra.mxu0 %v17
    %43 = vmatprep.subr.mxu0 0.0
    %44 = vmatpush1.xpose.msra.mxu0 %v18
    %45 = vmatprep.subr.mxu0 0.0
    %46 = vmatpush1.xpose.msra.mxu0 %v19
    %47 = vmatprep.subr.mxu0 0.0
    %48 = vmatpush1.xpose.msra.mxu0 %v20
    %49 = vmatprep.subr.mxu0 0.0
    %50 = vmatpush1.xpose.msra.mxu0 %v21
    %51 = vmatprep.subr.mxu0 0.0
    %52 = vmatpush1.xpose.msra.mxu0 %v22
    %53 = vmatprep.subr.mxu0 0.0
    %54 = vmatpush1.xpose.msra.mxu0 %v23
    %55 = vmatprep.subr.mxu0 0.0
    %56 = vmatpush1.xpose.msra.mxu0 %v24
    %57 = vmatprep.subr.mxu0 0.0
    %58 = vmatpush1.xpose.msra.mxu0 %v25
    %59 = vmatprep.subr.mxu0 0.0
    %60 = vmatpush1.xpose.msra.mxu0 %v26
    %61 = vmatprep.subr.mxu0 0.0
    %62 = vmatpush1.xpose.msra.mxu0 %v27
    %63 = vmatprep.subr.mxu0 0.0
    %64 = vmatpush1.xpose.msra.mxu0 %v28
    %65 = vmatprep.subr.mxu0 0.0
    %66 = vmatpush1.xpose.msra.mxu0 %v29
    %67 = vmatprep.subr.mxu0 0.0
    %68 = vmatpush1.xpose.msra.mxu0 %v30
    %69 = vmatprep.subr.mxu0 0.0
    %70 = vmatpush1.xpose.msra.mxu0 %v31
    %71 = vmatprep.subr.mxu0 0.0
    %72 = vmatpush1.xpose.msra.mxu0 0.0
    %73 = vmatprep.subr.mxu0 0.0
    %74 = vmatpush1.xpose.msra.mxu0 0.0
    %75 = vmatprep.subr.mxu0 0.0
    %76 = vmatpush1.xpose.msra.mxu0 0.0
    %77 = vmatprep.subr.mxu0 0.0
    %78 = vmatpush1.xpose.msra.mxu0 0.0
    %79 = vmatprep.subr.mxu0 0.0
    %80 = vmatpush1.xpose.msra.mxu0 0.0
    %81 = vmatprep.subr.mxu0 0.0
    %82 = vmatpush1.xpose.msra.mxu0 0.0
    %83 = vmatprep.subr.mxu0 0.0
    %84 = vmatpush1.xpose.msra.mxu0 0.0
    %85 = vmatprep.subr.mxu0 0.0
    %86 = vmatpush1.xpose.msra.mxu0 0.0
    %87 = vmatprep.subr.mxu0 0.0
    %88 = vmatpush1.xpose.msra.mxu0 0.0
    %89 = vmatprep.subr.mxu0 0.0
    %90 = vmatpush1.xpose.msra.mxu0 0.0
    %91 = vmatprep.subr.mxu0 0.0
    %92 = vmatpush1.xpose.msra.mxu0 0.0
    %93 = vmatprep.subr.mxu0 0.0
    %94 = vmatpush1.xpose.msra.mxu0 0.0
    %95 = vmatprep.subr.mxu0 0.0
    %96 = vmatpush1.xpose.msra.mxu0 0.0
    %97 = vmatprep.subr.mxu0 0.0
    %98 = vmatpush1.xpose.msra.mxu0 0.0
    %99 = vmatprep.subr.mxu0 0.0
    %100 = vmatpush1.xpose.msra.mxu0 0.0
    %101 = vmatprep.subr.mxu0 0.0
    %102 = vmatpush1.xpose.msra.mxu0 0.0
    %103 = vmatprep.mubr.f32.mxu0 0.0
    %104 = vmatmul.mubr.f32.gmra.mrb[0].mxu0 %v15
    %v105 = vpop.f32.mrb[0].mxu0
    %v106 = vadd.f32 %v37, %v105
    %v107 = vpop.f32.mrb[0].mxu0
    %108 = vdwg.mxu0
    %109 = vst [vmem:[#allocation2] sm:$0xff] %v106
    // Predicated region
    $region14: #{_last_layer_small.1} parent=1 // pred_check
      _
    $region15: #{_last_layer_small.1} parent=1 // pred_check_branch
      %111 = sbr.rel (0) target = $region17
    $region16: #{_last_layer_small.1} parent=1 // pred_region
      %s113 = ssub.s32 128, 128
      %114 = vsyncadd [#allocation3], %s113
      %s116 = sshll.u32 [#allocation2], 4
      %s117 = int_to_ptr.vmem [resolvable:$true] %s116
      %119 = dma.vmem_to_hbm [thread:$0]  %s117, 128, %s3, [#allocation3]
    $region17: #{_last_layer_small.1} parent=1 // pred_fallthru
      _
    // Predicated region
    $region18: #{_last_layer_small.1} parent=1 // pred_check
      _
    $region19: #{_last_layer_small.1} parent=1 // pred_check_branch
      %121 = sbr.rel (0) target = $region21
    $region20: #{_last_layer_small.1} parent=1 // pred_region
      %122 = dma.done [#allocation3], 128
    $region21: #{_last_layer_small.1} parent=1 // pred_fallthru
      _
    %123 = vsyncpa [#allocation3], 1

</llo_original>
